<compile_context>
chip_gen: v6e
topology: v6e:2x2x1
jax: 0.10.0
libtpu: 0.0.40
codegen_flags: <defaults>
</compile_context>

<pallas_src>
import functools

import jax
import jax.numpy as jnp
from jax.experimental import pallas as pl
from jax.experimental.pallas import tpu as pltpu


def _rnd(v, m):
    return ((v + m - 1) // m) * m


# --------------------------------------------------------------------------- kernel
def _gemm_scale_shift_kernel(x_ref, w_ref, s_ref, t_ref, o_ref, *, relu):
    """One (tm, tn) output tile; K reduction over grid axis 2, f32 acc in o_ref."""
    k = pl.program_id(2)

    @pl.when(k == 0)
    def _():
        o_ref[...] = jnp.zeros_like(o_ref)

    o_ref[...] += jnp.dot(x_ref[...], w_ref[...],
                          preferred_element_type=jnp.float32)

    @pl.when(k == pl.num_programs(2) - 1)
    def _():
        y = o_ref[...] * s_ref[...] + t_ref[...]
        if relu:
            y = jnp.maximum(y, 0.0)
        o_ref[...] = y


def fused_gemm(x, w, scale, shift, *, relu=True):
    """y = act((x @ w) * scale + shift).  x:(M,K) w:(K,N) scale,shift:(N,) -> (M,N) f32."""
    M, K = x.shape
    N = w.shape[1]

    # Shape-aware tiling (perf review): pad K/N to the 128-lane width only,
    # pick tk as a divisor of Kp, keep tm modest so M padding stays small.
    Kp = max(128, _rnd(K, 128))
    tk = next(d for d in (512, 384, 256, 128) if Kp % d == 0)
    Np = max(128, _rnd(N, 128))
    tn = 256 if Np % 256 == 0 else 128
    tm = _rnd(M, 8) if M < 256 else 256
    Mp = _rnd(M, tm)

    # bf16 matmul operands (MXU-native), f32 epilogue params.
    xp = jnp.pad(x, ((0, Mp - M), (0, Kp - K))).astype(jnp.bfloat16)
    wp = jnp.pad(w, ((0, Kp - K), (0, Np - N))).astype(jnp.bfloat16)
    sp = jnp.pad(scale, (0, Np - N)).astype(jnp.float32).reshape(1, Np)
    tp = jnp.pad(shift, (0, Np - N)).astype(jnp.float32).reshape(1, Np)

    out = pl.pallas_call(
        functools.partial(_gemm_scale_shift_kernel, relu=relu),
        out_shape=jax.ShapeDtypeStruct((Mp, Np), jnp.float32),
        grid=(Mp // tm, Np // tn, Kp // tk),
        in_specs=[
            pl.BlockSpec((tm, tk), lambda i, j, k: (i, k)),
            pl.BlockSpec((tk, tn), lambda i, j, k: (k, j)),
            pl.BlockSpec((1, tn), lambda i, j, k: (0, j)),
            pl.BlockSpec((1, tn), lambda i, j, k: (0, j)),
        ],
        out_specs=pl.BlockSpec((tm, tn), lambda i, j, k: (i, j)),
        compiler_params=pltpu.CompilerParams(
            dimension_semantics=("parallel", "parallel", "arbitrary")),
    )(xp, wp, sp, tp)
    return out[:M, :N]


# ------------------------------------------------------------------- module forward
def upsampler_block(params, x_nchw):
    """x: NCHW (B, Cin, H, W) -> NCHW (B, Cout, 2H, 2W)."""
    w = params['w']                      # (Cin, Cout, 3, 3)  PyTorch ConvTranspose2d layout
    b = params['b']                      # (Cout,)
    eps = 1e-3
    s = params['gamma'] / jnp.sqrt(params['var'] + eps)          # BN scale
    shift = (b - params['mean']) * s + params['beta']            # conv bias + BN shift

    B, Cin, H, W = x_nchw.shape
    Cout = w.shape[1]

    # 2x2 input-tap neighbourhood (zero pad one row/col on bottom/right), NHWC.
    x = jnp.transpose(x_nchw, (0, 2, 3, 1))
    xp = jnp.pad(x, ((0, 0), (0, 1), (0, 1), (0, 0)))
    taps = [xp[:, :H, :W, :],  xp[:, :H, 1:, :],                  # (i, j), (i, j+1)
            xp[:, 1:, :W, :],  xp[:, 1:, 1:, :]]                  # (i+1, j), (i+1, j+1)
    patches = jnp.concatenate(taps, axis=-1).reshape(B * H * W, 4 * Cin)

    # Phase weight matrix: output phases [EE, EO, OE, OO] along N, taps along K.
    #   out[2i  ,2j  ] = x[i,j]W11
    #   out[2i  ,2j+1] = x[i,j]W12 + x[i,j+1]W10
    #   out[2i+1,2j  ] = x[i,j]W21 + x[i+1,j]W01
    #   out[2i+1,2j+1] = x[i,j]W22 + x[i,j+1]W20 + x[i+1,j]W02 + x[i+1,j+1]W00
    Z = jnp.zeros((Cin, Cout), w.dtype)
    w_ee = jnp.concatenate([w[:, :, 1, 1], Z,             Z,             Z            ], axis=0)
    w_eo = jnp.concatenate([w[:, :, 1, 2], w[:, :, 1, 0], Z,             Z            ], axis=0)
    w_oe = jnp.concatenate([w[:, :, 2, 1], Z,             w[:, :, 0, 1], Z            ], axis=0)
    w_oo = jnp.concatenate([w[:, :, 2, 2], w[:, :, 2, 0], w[:, :, 0, 2], w[:, :, 0, 0]], axis=0)
    w_big = jnp.concatenate([w_ee, w_eo, w_oe, w_oo], axis=1)     # (4*Cin, 4*Cout)

    scale4 = jnp.tile(s, 4)
    shift4 = jnp.tile(shift, 4)

    y = fused_gemm(patches, w_big, scale4, shift4, relu=True)     # (B*H*W, 4*Cout)
    y = y.reshape(B, H, W, 2, 2, Cout)                            # (b, i, j, py, px, c)
    y = jnp.transpose(y, (0, 1, 3, 2, 4, 5)).reshape(B, 2 * H, 2 * W, Cout)
    return jnp.transpose(y, (0, 3, 1, 2))                         # NCHW


# ----------------------------------------------------------------------------- params
def init_params(key, cin, cout):
    kw, kb, kg, kbt, km, kv = jax.random.split(key, 6)
    fan = cout * 3 * 3
    w = (1.0 / fan ** 0.5) * jax.random.normal(kw, (cin, cout, 3, 3), jnp.float32)
    b = (1.0 / fan ** 0.5) * jax.random.uniform(kb, (cout,), jnp.float32, -1.0, 1.0)
    gamma = 1.0 + 0.1 * jax.random.normal(kg, (cout,), jnp.float32)
    beta = 0.1 * jax.random.normal(kbt, (cout,), jnp.float32)
    mean = 0.1 * jax.random.normal(km, (cout,), jnp.float32)
    var = 1.0 + 0.1 * jax.random.uniform(kv, (cout,), jnp.float32)
    return dict(w=w, b=b, gamma=gamma, beta=beta, mean=mean, var=var)


# -------------------------------------------------------------------- pure-JAX reference
def ref_forward(params, x):
    """ConvTranspose2d(3,s=2,p=1,op=1) + eval BN(eps=1e-3) + ReLU via dilated conv."""
    w = params['w']
    kern = jnp.flip(w, (2, 3)).transpose(1, 0, 2, 3)              # OIHW, spatially flipped
    y = jax.lax.conv_general_dilated(
        x, kern, window_strides=(1, 1), padding=((1, 2), (1, 2)),
        lhs_dilation=(2, 2), dimension_numbers=('NCHW', 'OIHW', 'NCHW'))
    y = y + params['b'][None, :, None, None]
    s = params['gamma'] / jnp.sqrt(params['var'] + 1e-3)
    t = params['beta'] - params['mean'] * s
    return jnp.maximum(y * s[None, :, None, None] + t[None, :, None, None], 0.0)


if __name__ == "__main__":
    key = jax.random.PRNGKey(0)
    kp, kx = jax.random.split(key)
    B, Cin, Cout, H, W = 2, 32, 16, 12, 20
    params = init_params(kp, Cin, Cout)
    x = jax.random.normal(kx, (B, Cin, H, W), jnp.float32)

    fwd = jax.jit(upsampler_block)
    out = fwd(params, x)
    jax.block_until_ready(out)

    assert out.shape == (B, Cout, 2 * H, 2 * W)
    assert bool(jnp.all(jnp.isfinite(out)))

    ref = ref_forward(params, x)
    err = float(jnp.max(jnp.abs(out - ref)))
    assert err < 5e-2, f"max abs err {err}"
    print("KERNEL_OK")
</pallas_src>

<mosaic_0001>
module attributes {stable_mosaic.version = 11 : i64} {
  func.func @_gemm_scale_shift_kernel(%arg0: i32, %arg1: i32, %arg2: i32, %arg3: memref<256x128xbf16, #tpu.memory_space<vmem>>, %arg4: memref<128x128xbf16, #tpu.memory_space<vmem>>, %arg5: memref<1x128xf32, #tpu.memory_space<vmem>>, %arg6: memref<1x128xf32, #tpu.memory_space<vmem>>, %arg7: memref<256x128xf32, #tpu.memory_space<vmem>>) attributes {dimension_semantics = [#tpu.dimension_semantics<parallel>, #tpu.dimension_semantics<parallel>, #tpu.dimension_semantics<arbitrary>], iteration_bounds = array<i64: 2, 1, 1>, scalar_prefetch = 0 : i64, scratch_operands = 0 : i64, tpu.core_type = #tpu.core_type<tc>, window_params = [{transform_indices = @transform_0, window_bounds = array<i64: 256, 128>}, {transform_indices = @transform_1, window_bounds = array<i64: 128, 128>}, {transform_indices = @transform_2, window_bounds = array<i64: 1, 128>}, {transform_indices = @transform_3, window_bounds = array<i64: 1, 128>}, {transform_indices = @transform_4, window_bounds = array<i64: 256, 128>}]} {
    %c0_i32 = arith.constant 0 : i32
    %0 = arith.cmpi eq, %arg2, %c0_i32 : i32
    %1 = arith.extui %0 : i1 to i32
    %c0_i32_0 = arith.constant 0 : i32
    %2 = arith.cmpi ne, %1, %c0_i32_0 : i32
    scf.if %2 {
      %cst_10 = arith.constant 0.000000e+00 : f32
      %12 = vector.broadcast %cst_10 : f32 to vector<256x128xf32>
      %c0_11 = arith.constant 0 : index
      %c0_12 = arith.constant 0 : index
      %13 = vector.load %arg7[%c0_11, %c0_12] : memref<256x128xf32, #tpu.memory_space<vmem>>, vector<256x128xf32>
      tpu.vector_store %arg7[%c0_11, %c0_12], %12 {strides = array<i32>} : memref<256x128xf32, #tpu.memory_space<vmem>>, vector<256x128xf32>,
    } else {
    }
    %c0 = arith.constant 0 : index
    %c0_1 = arith.constant 0 : index
    %3 = vector.load %arg7[%c0, %c0_1] : memref<256x128xf32, #tpu.memory_space<vmem>>, vector<256x128xf32>
    %c0_2 = arith.constant 0 : index
    %c0_3 = arith.constant 0 : index
    %4 = vector.load %arg3[%c0_2, %c0_3] : memref<256x128xbf16, #tpu.memory_space<vmem>>, vector<256x128xbf16>
    %c0_4 = arith.constant 0 : index
    %c0_5 = arith.constant 0 : index
    %5 = vector.load %arg4[%c0_4, %c0_5] : memref<128x128xbf16, #tpu.memory_space<vmem>>, vector<128x128xbf16>
    %cst = arith.constant dense<0.000000e+00> : vector<256x128xf32>
    %6 = tpu.matmul %4, %5, %cst {dimension_numbers = #tpu.dot_dimension_numbers<[1], [0], [0], [1], [0, 0, 1, 1], [], []>} : vector<256x128xbf16>, vector<128x128xbf16>, vector<256x128xf32> -> vector<256x128xf32>
    %7 = arith.addf %3, %6 : vector<256x128xf32>
    %c0_6 = arith.constant 0 : index
    %c0_7 = arith.constant 0 : index
    %8 = vector.load %arg7[%c0_6, %c0_7] : memref<256x128xf32, #tpu.memory_space<vmem>>, vector<256x128xf32>
    tpu.vector_store %arg7[%c0_6, %c0_7], %7 {strides = array<i32>} : memref<256x128xf32, #tpu.memory_space<vmem>>, vector<256x128xf32>,
    %c0_i32_8 = arith.constant 0 : i32
    %9 = arith.cmpi eq, %arg2, %c0_i32_8 : i32
    %10 = arith.extui %9 : i1 to i32
    %c0_i32_9 = arith.constant 0 : i32
    %11 = arith.cmpi ne, %10, %c0_i32_9 : i32
    scf.if %11 {
      %c0_10 = arith.constant 0 : index
      %c0_11 = arith.constant 0 : index
      %12 = vector.load %arg7[%c0_10, %c0_11] : memref<256x128xf32, #tpu.memory_space<vmem>>, vector<256x128xf32>
      %c0_12 = arith.constant 0 : index
      %c0_13 = arith.constant 0 : index
      %13 = vector.load %arg5[%c0_12, %c0_13] : memref<1x128xf32, #tpu.memory_space<vmem>>, vector<1x128xf32>
      %14 = vector.broadcast %13 : vector<1x128xf32> to vector<256x128xf32>
      %15 = arith.mulf %12, %14 : vector<256x128xf32>
      %c0_14 = arith.constant 0 : index
      %c0_15 = arith.constant 0 : index
      %16 = vector.load %arg6[%c0_14, %c0_15] : memref<1x128xf32, #tpu.memory_space<vmem>>, vector<1x128xf32>
      %17 = vector.broadcast %16 : vector<1x128xf32> to vector<256x128xf32>
      %18 = arith.addf %15, %17 : vector<256x128xf32>
      %cst_16 = arith.constant 0.000000e+00 : f32
      %19 = vector.broadcast %cst_16 : f32 to vector<256x128xf32>
      %20 = arith.maximumf %18, %19 : vector<256x128xf32>
      %c0_17 = arith.constant 0 : index
      %c0_18 = arith.constant 0 : index
      %21 = vector.load %arg7[%c0_17, %c0_18] : memref<256x128xf32, #tpu.memory_space<vmem>>, vector<256x128xf32>
      tpu.vector_store %arg7[%c0_17, %c0_18], %20 {strides = array<i32>} : memref<256x128xf32, #tpu.memory_space<vmem>>, vector<256x128xf32>,
    } else {
    }
    return
  }
  func.func @transform_0(%arg0: i32, %arg1: i32, %arg2: i32) -> (i32, i32) {
    %c0_i32 = arith.constant 0 : i32
    return %arg0, %arg2 : i32, i32
  }
  func.func @transform_1(%arg0: i32, %arg1: i32, %arg2: i32) -> (i32, i32) {
    %c0_i32 = arith.constant 0 : i32
    return %arg2, %arg1 : i32, i32
  }
  func.func @transform_2(%arg0: i32, %arg1: i32, %arg2: i32) -> (i32, i32) {
    %c0_i32 = arith.constant 0 : i32
    %c0_i32_0 = arith.constant 0 : i32
    return %c0_i32, %arg1 : i32, i32
  }
  func.func @transform_3(%arg0: i32, %arg1: i32, %arg2: i32) -> (i32, i32) {
    %c0_i32 = arith.constant 0 : i32
    %c0_i32_0 = arith.constant 0 : i32
    return %c0_i32, %arg1 : i32, i32
  }
  func.func @transform_4(%arg0: i32, %arg1: i32, %arg2: i32) -> (i32, i32) {
    %c0_i32 = arith.constant 0 : i32
    return %arg0, %arg1 : i32, i32
  }
}

</mosaic_0001>

<llo_original>
// kernel: tile.18
$region0: #{tile.18}
  #allocation0 [shape = 's32[1]{0}', space=sflag, size = 0x4, scoped, tag = 'scoped memory for tile.18']
  %s0 = inlined_call_operand.vmem [shape: f32[16], index: 0, kind: input, shape index: {}]
  %s1 = inlined_call_operand.vmem [shape: f32[4,16], index: 1, kind: output, shape index: {}]
  // Predicated region
  $region2: #{tile.18} parent=0 // pred_check
    _
  $region3: #{tile.18} parent=0 // pred_check_branch
    %3 = sbr.rel (0) target = $region5
  $region4: #{tile.18} parent=0 // pred_region
    _
  $region5: #{tile.18} parent=0 // pred_fallthru
    _
  %v4 = vld [vmem:[%s0] ss:$0 sm:$0xff]
  %5 = vst [vmem:[%s1] sm:$0xf] %v4

// kernel: tile.19
$region0: #{tile.19}
  %s0 = inlined_call_operand.vmem [shape: f32[4,16], index: 0, kind: input, shape index: {}]
  %s1 = inlined_call_operand.vmem [shape: f32[64], index: 1, kind: output, shape index: {}]
  $region1: #{tile.19} parent=0
    #allocation0 [shape = 'u8[4096]{0}', space=vmem, size = 0x1000, scoped, tag = 'scoped mem for output reshape']
    #allocation1 [shape = 'u8[4096]{0}', space=vmem, size = 0x1000, scoped, tag = 'scoped mem for input reshape']
    %s3 = sshll.u32 1, 4
    %s4 = ssub.s32 %s3, 1
    %v5 = vld [vmem:[%s0] sm:%s4]
    %6 = vst [vmem:[#allocation1] sm:%s4] %v5
    %v7 = vld [vmem:[#allocation1] sm:$0x1]
    %vm8 = vcmask 130048
    %9 = vst.msk [vmem:[#allocation0] sm:$0x1] %vm8, %v7
    %s10 = scalar_lea.vmem [#allocation1], 3
    %v11 = vld [vmem:[%s10] sm:$0x1]
    %12 = vrot.lane.b32.xlu0 %v11, 48
    %v13 = vpop.permute.xlu0 %12
    %vm14 = vcmask 523648
    %15 = vst.msk [vmem:[#allocation0] sm:$0x1] %vm14, %v13
    %s16 = scalar_lea.vmem [#allocation1], 2
    %v17 = vld [vmem:[%s16] sm:$0x1]
    %18 = vrot.lane.b32.xlu0 %v17, 32
    %v19 = vpop.permute.xlu0 %18
    %vm20 = vcmask 392448
    %21 = vst.msk [vmem:[#allocation0] sm:$0x1] %vm20, %v19
    %s22 = scalar_lea.vmem [#allocation1], 1
    %v23 = vld [vmem:[%s22] sm:$0x1]
    %24 = vrot.lane.b32.xlu0 %v23, 16
    %v25 = vpop.permute.xlu0 %24
    %vm26 = vcmask 261248
    %27 = vst.msk [vmem:[#allocation0] sm:$0x1] %vm26, %v25
    %s29 = sshll.u32 1, 1
    %s30 = ssub.s32 %s29, 1
    %v32 = vld [vmem:[#allocation0] sm:%s30]
    %s33 = sshll.u32 1, 1
    %s34 = ssub.s32 %s33, 1
    %35 = vst [vmem:[%s1] sm:%s34] %v32

// kernel: upsampler_block.1
$region0: #{upsampler_block.1}
  #allocation0 [shape = 'u32[]', space=smem, size = 0x4, offset = 0x4, fixed_abs, tag = 'smem constant byte address 0x4 - core index']
  #allocation1 [shape = 'u32[144,128]{1,0:T(1,128)}', space=vmem, size = 0x12000, scoped, tag = 'internal scratch']
  %s0 = inlined_call_operand.vmem [shape: bf16[512,128], index: 0, kind: input, shape index: {}]
  %s1 = inlined_call_operand.vmem [shape: bf16[128,128], index: 1, kind: input, shape index: {}]
  %s2 = inlined_call_operand.vmem [shape: f32[1,128], index: 2, kind: input, shape index: {}]
  %s3 = inlined_call_operand.vmem [shape: f32[1,128], index: 3, kind: input, shape index: {}]
  %s4 = inlined_call_operand.vmem [shape: f32[512,128], index: 4, kind: output, shape index: {}]
  %s5 = sld [smem:[#allocation0]]
  $region57: #{upsampler_block.1} parent=0
    _
  %s7 = ssub.s32 1, %s5
  %s8 = scalar_select 0, %s7, %s5
  loop: start=0, step=1, limit=4
  $region2: #{upsampler_block.1} parent=0 // loop_pre_header
    _
  $region3: #{upsampler_block.1} parent=0 // loop_header
    %s10 = sphi 0, %s14
    %p11 = scmp.ge.s32.totalorder %s10, 4
    %s17 = sphi 0, %s36
    %s18 = sphi 0, %s32
    %s19 = sphi 0, %s28
    %s20 = sphi 0, %s17
    %s21 = sphi 0, %s18
    %s22 = sphi 0, %s19
    %s23 = sphi 0, %s20
    %s24 = sphi 0, %s21
    %s25 = sphi 0, %s22
    %s41 = sphi 0, %s43
    %s44 = sphi 0, %s41
    %s45 = sphi 0, %s44
    %s61 = sphi 0, %s45
    %s69 = sphi 0, %s71
    %s72 = sphi 0, %s69
    %s73 = sphi 0, %s72
    %s89 = sphi 0, %s73
    %s95 = sphi 0, %s97
    %s98 = sphi 0, %s95
    %s99 = sphi 0, %s98
    %s115 = sphi 0, %s99
    %s121 = sphi 0, %s123
    %s124 = sphi 0, %s121
    %s125 = sphi 0, %s124
    %s141 = sphi 0, %s125
    %s149 = sphi 0, %s151
    %s152 = sphi 0, %s149
    %s153 = sphi 0, %s152
    %s169 = sphi 0, %s153
  $region4: #{upsampler_block.1} parent=0 // loop_header_branch
    %13 = sbr.rel (%p11) target = $region8
  $region5: #{upsampler_block.1} parent=0 // loop_body
    %s15 = ssub.s32 %s10, 1
    %s16 = ssub.s32 %s10, 2
    %s26 = sadd.s32 1, %s19
    %p27 = scmp.ge.s32.totalorder %s26, 1
    %s28 = scalar_select %p27, 0, %s26
    %s29 = sadd.s32 1, %s18
    %s30 = scalar_select %p27, %s29, %s18
    %p31 = scmp.ge.s32.totalorder %s30, 1
    %s32 = scalar_select %p31, 0, %s30
    %s33 = sadd.s32 1, %s17
    %s34 = scalar_select %p31, %s33, %s17
    %p35 = scmp.ge.s32.totalorder %s34, 2
    %s36 = scalar_select %p35, 0, %s34
    %s37 = ssub.s32 %s17, %s36
    %s38 = ssub.s32 %s19, %s28
    %s39 = sor.u32 %s37, %s38
    %p40 = scmp.eq.s32.totalorder %s39, 0
    %s42 = sadd.s32 %s41, 1
    %s43 = scalar_select %p40, %s41, %s42
    %p46 = pneg %p40
    %p47 = scmp.eq.s32.totalorder %s10, 1
    %p48 = por %p46, %p47
    %p49 = scmp.ne.s32.totalorder %s41, %s44
    %p50 = scmp.eq.s32.totalorder %s10, 0
    %p51 = por %p49, %p50
    %p52 = scmp.ne.s32.totalorder %s41, %s44
    %p53 = scmp.eq.s32.totalorder %s15, 1
    %p54 = por %p52, %p53
    %p55 = scmp.ne.s32.totalorder %s44, %s45
    %p56 = scmp.eq.s32.totalorder %s15, 0
    %p57 = por %p55, %p56
    %p58 = scmp.ne.s32.totalorder %s44, %s45
    %p59 = scmp.eq.s32.totalorder %s16, 1
    %p60 = por %p58, %p59
    %p62 = scmp.ne.s32.totalorder %s45, %s61
    %p63 = scmp.eq.s32.totalorder %s16, 0
    %p64 = por %p62, %p63
    %s65 = ssub.s32 %s19, %s28
    %s66 = ssub.s32 %s18, %s32
    %s67 = sor.u32 %s65, %s66
    %p68 = scmp.eq.s32.totalorder %s67, 0
    %s70 = sadd.s32 %s69, 1
    %s71 = scalar_select %p68, %s69, %s70
    %p74 = pneg %p68
    %p75 = scmp.eq.s32.totalorder %s10, 1
    %p76 = por %p74, %p75
    %p77 = scmp.ne.s32.totalorder %s69, %s72
    %p78 = scmp.eq.s32.totalorder %s10, 0
    %p79 = por %p77, %p78
    %p80 = scmp.ne.s32.totalorder %s69, %s72
    %p81 = scmp.eq.s32.totalorder %s15, 1
    %p82 = por %p80, %p81
    %p83 = scmp.ne.s32.totalorder %s72, %s73
    %p84 = scmp.eq.s32.totalorder %s15, 0
    %p85 = por %p83, %p84
    %p86 = scmp.ne.s32.totalorder %s72, %s73
    %p87 = scmp.eq.s32.totalorder %s16, 1
    %p88 = por %p86, %p87
    %p90 = scmp.ne.s32.totalorder %s73, %s89
    %p91 = scmp.eq.s32.totalorder %s16, 0
    %p92 = por %p90, %p91
    %s93 = ssub.s32 %s18, %s32
    %p94 = scmp.eq.s32.totalorder %s93, 0
    %s96 = sadd.s32 %s95, 1
    %s97 = scalar_select %p94, %s95, %s96
    %p100 = pneg %p94
    %p101 = scmp.eq.s32.totalorder %s10, 1
    %p102 = por %p100, %p101
    %p103 = scmp.ne.s32.totalorder %s95, %s98
    %p104 = scmp.eq.s32.totalorder %s10, 0
    %p105 = por %p103, %p104
    %p106 = scmp.ne.s32.totalorder %s95, %s98
    %p107 = scmp.eq.s32.totalorder %s15, 1
    %p108 = por %p106, %p107
    %p109 = scmp.ne.s32.totalorder %s98, %s99
    %p110 = scmp.eq.s32.totalorder %s15, 0
    %p111 = por %p109, %p110
    %p112 = scmp.ne.s32.totalorder %s98, %s99
    %p113 = scmp.eq.s32.totalorder %s16, 1
    %p114 = por %p112, %p113
    %p116 = scmp.ne.s32.totalorder %s99, %s115
    %p117 = scmp.eq.s32.totalorder %s16, 0
    %p118 = por %p116, %p117
    %s119 = ssub.s32 %s18, %s32
    %p120 = scmp.eq.s32.totalorder %s119, 0
    %s122 = sadd.s32 %s121, 1
    %s123 = scalar_select %p120, %s121, %s122
    %p126 = pneg %p120
    %p127 = scmp.eq.s32.totalorder %s10, 1
    %p128 = por %p126, %p127
    %p129 = scmp.ne.s32.totalorder %s121, %s124
    %p130 = scmp.eq.s32.totalorder %s10, 0
    %p131 = por %p129, %p130
    %p132 = scmp.ne.s32.totalorder %s121, %s124
    %p133 = scmp.eq.s32.totalorder %s15, 1
    %p134 = por %p132, %p133
    %p135 = scmp.ne.s32.totalorder %s124, %s125
    %p136 = scmp.eq.s32.totalorder %s15, 0
    %p137 = por %p135, %p136
    %p138 = scmp.ne.s32.totalorder %s124, %s125
    %p139 = scmp.eq.s32.totalorder %s16, 1
    %p140 = por %p138, %p139
    %p142 = scmp.ne.s32.totalorder %s125, %s141
    %p143 = scmp.eq.s32.totalorder %s16, 0
    %p144 = por %p142, %p143
    %s145 = ssub.s32 %s17, %s36
    %s146 = ssub.s32 %s18, %s32
    %s147 = sor.u32 %s145, %s146
    %p148 = scmp.eq.s32.totalorder %s147, 0
    %s150 = sadd.s32 %s149, 1
    %s151 = scalar_select %p148, %s149, %s150
    %p154 = pneg %p148
    %p155 = scmp.eq.s32.totalorder %s10, 1
    %p156 = por %p154, %p155
    %p157 = scmp.ne.s32.totalorder %s149, %s152
    %p158 = scmp.eq.s32.totalorder %s10, 0
    %p159 = por %p157, %p158
    %p160 = scmp.ne.s32.totalorder %s149, %s152
    %p161 = scmp.eq.s32.totalorder %s15, 1
    %p162 = por %p160, %p161
    %p163 = scmp.ne.s32.totalorder %s152, %s153
    %p164 = scmp.eq.s32.totalorder %s15, 0
    %p165 = por %p163, %p164
    %p166 = scmp.ne.s32.totalorder %s152, %s153
    %p167 = scmp.eq.s32.totalorder %s16, 1
    %p168 = por %p166, %p167
    %p170 = scmp.ne.s32.totalorder %s153, %s169
    %p171 = scmp.eq.s32.totalorder %s16, 0
    %p172 = por %p170, %p171
    %p173 = scmp.le.s32.totalorder 1, %s10
    %p174 = scmp.lt.s32.totalorder %s10, 3
    %p175 = pnand %p173, %p174
    %p176 = pneg %p175
    // Predicated region
    $region9: #{upsampler_block.1} parent=5 // pred_check
      _
    $region10: #{upsampler_block.1} parent=5 // pred_check_branch
      %178 = sbr.rel (%p175) target = $region12
    $region11: #{upsampler_block.1} parent=5 // pred_region
      %s179 = ssub.s32 %s10, 1
      // Predicated region
      $region13: #{upsampler_block.1} parent=11 // pred_check
        %p180 = pneg %p85
      $region14: #{upsampler_block.1} parent=11 // pred_check_branch
        %182 = sbr.rel (%p180) target = $region16
      $region15: #{upsampler_block.1} parent=11 // pred_region
        %s183 = smul.u32 16, %s22
        %p184 = scmp.lt.s32.totalorder %s183, 15
        %s185 = scalar_select %p184, %s183, 15
        %p186 = scmp.lt.s32.totalorder %s21, 0
        %s187 = scalar_select %p186, %s21, 0
        %s188 = sadd.s32 %s187, %s185
        %s189 = smul.addr %s188, 4
        %s190 = scalar_lea.vmem %s1, %s189
        %s191 = smul.u32 16, %s22
      $region16: #{upsampler_block.1} parent=11 // pred_fallthru
        _
      // Predicated region
      $region17: #{upsampler_block.1} parent=11 // pred_check
        %p192 = pneg %p111
      $region18: #{upsampler_block.1} parent=11 // pred_check_branch
        %194 = sbr.rel (%p192) target = $region20
      $region19: #{upsampler_block.1} parent=11 // pred_region
        %p195 = scmp.lt.s32.totalorder %s21, 0
        %s196 = scalar_select %p195, %s21, 0
        %s197 = scalar_lea.vmem %s2, %s196
      $region20: #{upsampler_block.1} parent=11 // pred_fallthru
        _
      // Predicated region
      $region21: #{upsampler_block.1} parent=11 // pred_check
        %p198 = pneg %p137
      $region22: #{upsampler_block.1} parent=11 // pred_check_branch
        %200 = sbr.rel (%p198) target = $region24
      $region23: #{upsampler_block.1} parent=11 // pred_region
        %p201 = scmp.lt.s32.totalorder %s21, 0
        %s202 = scalar_select %p201, %s21, 0
        %s203 = scalar_lea.vmem %s3, %s202
      $region24: #{upsampler_block.1} parent=11 // pred_fallthru
        _
    $region12: #{upsampler_block.1} parent=5 // pred_fallthru
      _
    %p204 = scmp.lt.s32.totalorder %s10, 2
    // Predicated region
    $region25: #{upsampler_block.1} parent=5 // pred_check
      %p205 = pneg %p204
    $region26: #{upsampler_block.1} parent=5 // pred_check_branch
      %207 = sbr.rel (%p205) target = $region28
    $region27: #{upsampler_block.1} parent=5 // pred_region
      // Predicated region
      $region29: #{upsampler_block.1} parent=27 // pred_check
        %p208 = pneg %p51
      $region30: #{upsampler_block.1} parent=27 // pred_check_branch
        %210 = sbr.rel (%p208) target = $region32
      $region31: #{upsampler_block.1} parent=27 // pred_region
        %s211 = smul.u32 32, %s17
        %p212 = scmp.lt.s32.totalorder %s211, 63
        %s213 = scalar_select %p212, %s211, 63
        %p214 = scmp.lt.s32.totalorder %s19, 0
        %s215 = scalar_select %p214, %s19, 0
        %s216 = sadd.s32 %s215, %s213
        %s217 = smul.addr %s216, 4
        %s218 = scalar_lea.vmem %s0, %s217
        %s219 = smul.u32 32, %s17
      $region32: #{upsampler_block.1} parent=27 // pred_fallthru
        _
    $region28: #{upsampler_block.1} parent=5 // pred_fallthru
      _
    %p220 = scmp.le.s32.totalorder 1, %s10
    %p221 = scmp.lt.s32.totalorder %s10, 3
    %p222 = pnand %p220, %p221
    %p223 = pneg %p222
    // Predicated region
    $region33: #{upsampler_block.1} parent=5 // pred_check
      _
    $region34: #{upsampler_block.1} parent=5 // pred_check_branch
      %225 = sbr.rel (%p222) target = $region36
    $region35: #{upsampler_block.1} parent=5 // pred_region
      %s226 = ssub.s32 %s10, 1
      %s227 = smul.u32 32, %s20
      %p228 = scmp.lt.s32.totalorder %s227, 63
      %s229 = scalar_select %p228, %s227, 63
      %p230 = scmp.lt.s32.totalorder %s22, 0
      %s231 = scalar_select %p230, %s22, 0
      %s232 = sadd.s32 %s231, %s229
      %s233 = smul.addr %s232, 4
      %s234 = scalar_lea.vmem %s0, %s233
      %p235 = pneg %p57
      %p236 = pneg %p54
      %s237 = smul.u32 16, %s22
      %p238 = scmp.lt.s32.totalorder %s237, 15
      %s239 = scalar_select %p238, %s237, 15
      %p240 = scmp.lt.s32.totalorder %s21, 0
      %s241 = scalar_select %p240, %s21, 0
      %s242 = sadd.s32 %s241, %s239
      %s243 = smul.addr %s242, 4
      %s244 = scalar_lea.vmem %s1, %s243
      %p245 = pneg %p85
      %p246 = pneg %p82
      %p247 = scmp.lt.s32.totalorder %s21, 0
      %s248 = scalar_select %p247, %s21, 0
      %s249 = scalar_lea.vmem %s2, %s248
      %p250 = pneg %p111
      %p251 = pneg %p108
      %p252 = scmp.lt.s32.totalorder %s21, 0
      %s253 = scalar_select %p252, %s21, 0
      %s254 = scalar_lea.vmem %s3, %s253
      %p255 = pneg %p137
      %p256 = pneg %p134
      %p257 = pneg %p165
      %p258 = pneg %p162
      %s259 = smul.u32 32, %s20
      %p260 = scmp.lt.s32.totalorder %s259, 63
      %s261 = scalar_select %p260, %s259, 63
      %p262 = scmp.lt.s32.totalorder %s21, 0
      %s263 = scalar_select %p262, %s21, 0
      %s264 = sadd.s32 %s263, %s261
      %s265 = smul.addr %s264, 8
      %s266 = scalar_lea.vmem %s4, %s265
      %s267 = smul.u32 32, %s20
      %p268 = scmp.lt.s32.totalorder %s267, 63
      %s269 = scalar_select %p268, %s267, 63
      %p270 = scmp.lt.s32.totalorder %s22, 0
      %s271 = scalar_select %p270, %s22, 0
      %s272 = sadd.s32 %s271, %s269
      %s273 = smul.addr %s272, 4
      %s274 = scalar_lea.vmem %s0, %s273
      %s275 = smul.u32 32, %s20
      %s276 = smul.u32 16, %s22
      %p277 = scmp.lt.s32.totalorder %s276, 15
      %s278 = scalar_select %p277, %s276, 15
      %p279 = scmp.lt.s32.totalorder %s21, 0
      %s280 = scalar_select %p279, %s21, 0
      %s281 = sadd.s32 %s280, %s278
      %s282 = smul.addr %s281, 4
      %s283 = scalar_lea.vmem %s1, %s282
      %s284 = smul.u32 16, %s22
      %p285 = scmp.lt.s32.totalorder %s21, 0
      %s286 = scalar_select %p285, %s21, 0
      %s287 = scalar_lea.vmem %s2, %s286
      %p288 = scmp.lt.s32.totalorder %s21, 0
      %s289 = scalar_select %p288, %s21, 0
      %s290 = scalar_lea.vmem %s3, %s289
      %s291 = smul.u32 32, %s20
      %p292 = scmp.lt.s32.totalorder %s291, 63
      %s293 = scalar_select %p292, %s291, 63
      %p294 = scmp.lt.s32.totalorder %s21, 0
      %s295 = scalar_select %p294, %s21, 0
      %s296 = sadd.s32 %s295, %s293
      %s297 = smul.addr %s296, 8
      %s298 = scalar_lea.vmem %s4, %s297
      %s299 = smul.u32 32, %s20
      %p301 = scmp.eq.s32.totalorder %s22, 0
      // Predicated region
      $region37: #{upsampler_block.1} parent=35 // pred_check
        %p302 = pneg %p301
      $region38: #{upsampler_block.1} parent=35 // pred_check_branch
        %304 = sbr.rel (%p302) target = $region40
      $region39: #{upsampler_block.1} parent=35 // pred_region
        %305 = vst [vmem:[%s298] sm:$0xff] 0.0
        %306 = vst [vmem:[%s298 + $0x8] sm:$0xff] 0.0
        %307 = vst [vmem:[%s298 + $0x10] sm:$0xff] 0.0
        %308 = vst [vmem:[%s298 + $0x18] sm:$0xff] 0.0
        %309 = vst [vmem:[%s298 + $0x20] sm:$0xff] 0.0
        %310 = vst [vmem:[%s298 + $0x28] sm:$0xff] 0.0
        %311 = vst [vmem:[%s298 + $0x30] sm:$0xff] 0.0
        %312 = vst [vmem:[%s298 + $0x38] sm:$0xff] 0.0
        %313 = vst [vmem:[%s298 + $0x40] sm:$0xff] 0.0
        %314 = vst [vmem:[%s298 + $0x48] sm:$0xff] 0.0
        %315 = vst [vmem:[%s298 + $0x50] sm:$0xff] 0.0
        %316 = vst [vmem:[%s298 + $0x58] sm:$0xff] 0.0
        %317 = vst [vmem:[%s298 + $0x60] sm:$0xff] 0.0
        %318 = vst [vmem:[%s298 + $0x68] sm:$0xff] 0.0
        %319 = vst [vmem:[%s298 + $0x70] sm:$0xff] 0.0
        %320 = vst [vmem:[%s298 + $0x78] sm:$0xff] 0.0
        %321 = vst [vmem:[%s298 + $0x80] sm:$0xff] 0.0
        %322 = vst [vmem:[%s298 + $0x88] sm:$0xff] 0.0
        %323 = vst [vmem:[%s298 + $0x90] sm:$0xff] 0.0
        %324 = vst [vmem:[%s298 + $0x98] sm:$0xff] 0.0
        %325 = vst [vmem:[%s298 + $0xa0] sm:$0xff] 0.0
        %326 = vst [vmem:[%s298 + $0xa8] sm:$0xff] 0.0
        %327 = vst [vmem:[%s298 + $0xb0] sm:$0xff] 0.0
        %328 = vst [vmem:[%s298 + $0xb8] sm:$0xff] 0.0
        %329 = vst [vmem:[%s298 + $0xc0] sm:$0xff] 0.0
        %330 = vst [vmem:[%s298 + $0xc8] sm:$0xff] 0.0
        %331 = vst [vmem:[%s298 + $0xd0] sm:$0xff] 0.0
        %332 = vst [vmem:[%s298 + $0xd8] sm:$0xff] 0.0
        %333 = vst [vmem:[%s298 + $0xe0] sm:$0xff] 0.0
        %334 = vst [vmem:[%s298 + $0xe8] sm:$0xff] 0.0
        %335 = vst [vmem:[%s298 + $0xf0] sm:$0xff] 0.0
        %336 = vst [vmem:[%s298 + $0xf8] sm:$0xff] 0.0
      $region40: #{upsampler_block.1} parent=35 // pred_fallthru
        _
      %v337 = vld [vmem:[%s298] sm:$0xff]
      %v338 = vld [vmem:[%s298 + $0x8] sm:$0xff]
      %v339 = vld [vmem:[%s298 + $0x10] sm:$0xff]
      %v340 = vld [vmem:[%s298 + $0x18] sm:$0xff]
      %v341 = vld [vmem:[%s298 + $0x20] sm:$0xff]
      %v342 = vld [vmem:[%s298 + $0x28] sm:$0xff]
      %v343 = vld [vmem:[%s298 + $0x30] sm:$0xff]
      %v344 = vld [vmem:[%s298 + $0x38] sm:$0xff]
      %v345 = vld [vmem:[%s298 + $0x40] sm:$0xff]
      %v346 = vld [vmem:[%s298 + $0x48] sm:$0xff]
      %v347 = vld [vmem:[%s298 + $0x50] sm:$0xff]
      %v348 = vld [vmem:[%s298 + $0x58] sm:$0xff]
      %v349 = vld [vmem:[%s298 + $0x60] sm:$0xff]
      %v350 = vld [vmem:[%s298 + $0x68] sm:$0xff]
      %v351 = vld [vmem:[%s298 + $0x70] sm:$0xff]
      %v352 = vld [vmem:[%s298 + $0x78] sm:$0xff]
      %v353 = vld [vmem:[%s298 + $0x80] sm:$0xff]
      %v354 = vld [vmem:[%s298 + $0x88] sm:$0xff]
      %v355 = vld [vmem:[%s298 + $0x90] sm:$0xff]
      %v356 = vld [vmem:[%s298 + $0x98] sm:$0xff]
      %v357 = vld [vmem:[%s298 + $0xa0] sm:$0xff]
      %v358 = vld [vmem:[%s298 + $0xa8] sm:$0xff]
      %v359 = vld [vmem:[%s298 + $0xb0] sm:$0xff]
      %v360 = vld [vmem:[%s298 + $0xb8] sm:$0xff]
      %v361 = vld [vmem:[%s298 + $0xc0] sm:$0xff]
      %v362 = vld [vmem:[%s298 + $0xc8] sm:$0xff]
      %v363 = vld [vmem:[%s298 + $0xd0] sm:$0xff]
      %v364 = vld [vmem:[%s298 + $0xd8] sm:$0xff]
      %v365 = vld [vmem:[%s298 + $0xe0] sm:$0xff]
      %v366 = vld [vmem:[%s298 + $0xe8] sm:$0xff]
      %v367 = vld [vmem:[%s298 + $0xf0] sm:$0xff]
      %v368 = vld [vmem:[%s298 + $0xf8] sm:$0xff]
      %v369 = vld [vmem:[%s274] sm:$0xf]
      %v370 = vld [vmem:[%s274 + $0x4] sm:$0xf]
      %v371 = vld [vmem:[%s274 + $0x8] sm:$0xf]
      %v372 = vld [vmem:[%s274 + $0xc] sm:$0xf]
      %v373 = vld [vmem:[%s274 + $0x10] sm:$0xf]
      %v374 = vld [vmem:[%s274 + $0x14] sm:$0xf]
      %v375 = vld [vmem:[%s274 + $0x18] sm:$0xf]
      %v376 = vld [vmem:[%s274 + $0x1c] sm:$0xf]
      %v377 = vld [vmem:[%s274 + $0x20] sm:$0xf]
      %v378 = vld [vmem:[%s274 + $0x24] sm:$0xf]
      %v379 = vld [vmem:[%s274 + $0x28] sm:$0xf]
      %v380 = vld [vmem:[%s274 + $0x2c] sm:$0xf]
      %v381 = vld [vmem:[%s274 + $0x30] sm:$0xf]
      %v382 = vld [vmem:[%s274 + $0x34] sm:$0xf]
      %v383 = vld [vmem:[%s274 + $0x38] sm:$0xf]
      %v384 = vld [vmem:[%s274 + $0x3c] sm:$0xf]
      %v385 = vld [vmem:[%s274 + $0x40] sm:$0xf]
      %v386 = vld [vmem:[%s274 + $0x44] sm:$0xf]
      %v387 = vld [vmem:[%s274 + $0x48] sm:$0xf]
      %v388 = vld [vmem:[%s274 + $0x4c] sm:$0xf]
      %v389 = vld [vmem:[%s274 + $0x50] sm:$0xf]
      %v390 = vld [vmem:[%s274 + $0x54] sm:$0xf]
      %v391 = vld [vmem:[%s274 + $0x58] sm:$0xf]
      %v392 = vld [vmem:[%s274 + $0x5c] sm:$0xf]
      %v393 = vld [vmem:[%s274 + $0x60] sm:$0xf]
      %v394 = vld [vmem:[%s274 + $0x64] sm:$0xf]
      %v395 = vld [vmem:[%s274 + $0x68] sm:$0xf]
      %v396 = vld [vmem:[%s274 + $0x6c] sm:$0xf]
      %v397 = vld [vmem:[%s274 + $0x70] sm:$0xf]
      %v398 = vld [vmem:[%s274 + $0x74] sm:$0xf]
      %v399 = vld [vmem:[%s274 + $0x78] sm:$0xf]
      %v400 = vld [vmem:[%s274 + $0x7c] sm:$0xf]
      %v401 = vld [vmem:[%s283] sm:$0xf]
      %v402 = vld [vmem:[%s283 + $0x4] sm:$0xf]
      %v403 = vld [vmem:[%s283 + $0x8] sm:$0xf]
      %v404 = vld [vmem:[%s283 + $0xc] sm:$0xf]
      %v405 = vld [vmem:[%s283 + $0x10] sm:$0xf]
      %v406 = vld [vmem:[%s283 + $0x14] sm:$0xf]
      %v407 = vld [vmem:[%s283 + $0x18] sm:$0xf]
      %v408 = vld [vmem:[%s283 + $0x1c] sm:$0xf]
      %v409 = vld [vmem:[%s283 + $0x20] sm:$0xf]
      %v410 = vld [vmem:[%s283 + $0x24] sm:$0xf]
      %v411 = vld [vmem:[%s283 + $0x28] sm:$0xf]
      %v412 = vld [vmem:[%s283 + $0x2c] sm:$0xf]
      %v413 = vld [vmem:[%s283 + $0x30] sm:$0xf]
      %v414 = vld [vmem:[%s283 + $0x34] sm:$0xf]
      %v415 = vld [vmem:[%s283 + $0x38] sm:$0xf]
      %v416 = vld [vmem:[%s283 + $0x3c] sm:$0xf]
      %v449 = vunpack.c.l.b16 %v369
      %v450 = vunpack.c.l.b16 %v370
      %v451 = vunpack.c.l.b16 %v371
      %v452 = vunpack.c.l.b16 %v372
      %v453 = vunpack.c.l.b16 %v373
      %v454 = vunpack.c.l.b16 %v374
      %v455 = vunpack.c.l.b16 %v375
      %v456 = vunpack.c.l.b16 %v376
      %v457 = vunpack.c.l.b16 %v377
      %v458 = vunpack.c.l.b16 %v378
      %v459 = vunpack.c.l.b16 %v379
      %v460 = vunpack.c.l.b16 %v380
      %v461 = vunpack.c.l.b16 %v381
      %v462 = vunpack.c.l.b16 %v382
      %v463 = vunpack.c.l.b16 %v383
      %v464 = vunpack.c.l.b16 %v384
      %v465 = vunpack.c.l.b16 %v385
      %v466 = vunpack.c.l.b16 %v386
      %v467 = vunpack.c.l.b16 %v387
      %v468 = vunpack.c.l.b16 %v388
      %v469 = vunpack.c.l.b16 %v389
      %v470 = vunpack.c.l.b16 %v390
      %v471 = vunpack.c.l.b16 %v391
      %v472 = vunpack.c.l.b16 %v392
      %v473 = vunpack.c.l.b16 %v393
      %v474 = vunpack.c.l.b16 %v394
      %v475 = vunpack.c.l.b16 %v395
      %v476 = vunpack.c.l.b16 %v396
      %v477 = vunpack.c.l.b16 %v397
      %v478 = vunpack.c.l.b16 %v398
      %v479 = vunpack.c.l.b16 %v399
      %v480 = vunpack.c.l.b16 %v400
      %v481 = vpack.c.b16 %v450, %v449
      %v482 = vpack.c.b16 %v452, %v451
      %v483 = vpack.c.b16 %v454, %v453
      %v484 = vpack.c.b16 %v456, %v455
      %v485 = vpack.c.b16 %v458, %v457
      %v486 = vpack.c.b16 %v460, %v459
      %v487 = vpack.c.b16 %v462, %v461
      %v488 = vpack.c.b16 %v464, %v463
      %v489 = vpack.c.b16 %v466, %v465
      %v490 = vpack.c.b16 %v468, %v467
      %v491 = vpack.c.b16 %v470, %v469
      %v492 = vpack.c.b16 %v472, %v471
      %v493 = vpack.c.b16 %v474, %v473
      %v494 = vpack.c.b16 %v476, %v475
      %v495 = vpack.c.b16 %v478, %v477
      %v496 = vpack.c.b16 %v480, %v479
      %v529 = vunpack.c.l.b16 %v401
      %v530 = vunpack.c.l.b16 %v402
      %v531 = vunpack.c.l.b16 %v403
      %v532 = vunpack.c.l.b16 %v404
      %v533 = vunpack.c.l.b16 %v405
      %v534 = vunpack.c.l.b16 %v406
      %v535 = vunpack.c.l.b16 %v407
      %v536 = vunpack.c.l.b16 %v408
      %v537 = vunpack.c.l.b16 %v409
      %v538 = vunpack.c.l.b16 %v410
      %v539 = vunpack.c.l.b16 %v411
      %v540 = vunpack.c.l.b16 %v412
      %v541 = vunpack.c.l.b16 %v413
      %v542 = vunpack.c.l.b16 %v414
      %v543 = vunpack.c.l.b16 %v415
      %v544 = vunpack.c.l.b16 %v416
      %v545 = vpack.c.b16 %v530, %v529
      %v546 = vpack.c.b16 %v532, %v531
      %v547 = vpack.c.b16 %v534, %v533
      %v548 = vpack.c.b16 %v536, %v535
      %v549 = vpack.c.b16 %v538, %v537
      %v550 = vpack.c.b16 %v540, %v539
      %v551 = vpack.c.b16 %v542, %v541
      %v552 = vpack.c.b16 %v544, %v543
      %561 = vmatprep.subr.bf16.mxu0 0
      %562 = vmatpush1.bf16.msra.mxu0 %v552
      %563 = vmatprep.subr.bf16.mxu0 0
      %564 = vmatpush1.bf16.msra.mxu0 %v551
      %565 = vmatprep.subr.bf16.mxu0 0
      %566 = vmatpush1.bf16.msra.mxu0 %v550
      %567 = vmatprep.subr.bf16.mxu0 0
      %568 = vmatpush1.bf16.msra.mxu0 %v549
      %569 = vmatprep.subr.bf16.mxu0 0
      %570 = vmatpush1.bf16.msra.mxu0 %v548
      %571 = vmatprep.subr.bf16.mxu0 0
      %572 = vmatpush1.bf16.msra.mxu0 %v547
      %573 = vmatprep.subr.bf16.mxu0 0
      %574 = vmatpush1.bf16.msra.mxu0 %v546
      %575 = vmatprep.subr.bf16.mxu0 0
      %576 = vmatpush1.bf16.msra.mxu0 %v545
      %577 = vmatprep.subr.bf16.mxu0 0
      %578 = vmatpush2.bf16.msra.mxu0 0
      %579 = vmatprep.subr.bf16.mxu0 0
      %580 = vmatpush2.bf16.msra.mxu0 0
      %581 = vmatprep.subr.bf16.mxu0 0
      %582 = vmatpush2.bf16.msra.mxu0 0
      %583 = vmatprep.subr.bf16.mxu0 0
      %584 = vmatpush2.bf16.msra.mxu0 0
      %585 = vmatprep.subr.bf16.mxu0 0
      %586 = vmatpush2.bf16.msra.mxu0 0
      %587 = vmatprep.subr.bf16.mxu0 0
      %588 = vmatpush2.bf16.msra.mxu0 0
      %589 = vmatprep.subr.bf16.mxu0 0
      %590 = vmatpush2.bf16.msra.mxu0 0
      %591 = vmatprep.subr.bf16.mxu0 0
      %592 = vmatpush2.bf16.msra.mxu0 0
      %593 = vmatprep.mubr.bf16.mxu0 0
      %594 = vmatmul.mubr.bf16.gmra.mxu0 %v481
      %v595 = vpop.f32.mrf.mxu0
      %v596 = vadd.f32 0.0, %v595
      %v597 = vpop.f32.mrf.mxu0
      %v598 = vpop.f32.mrf.mxu0
      %v599 = vadd.f32 0.0, %v598
      %v600 = vpop.f32.mrf.mxu0
      %601 = vmatprep.mubr.bf16.mxu0 0
      %602 = vmatmul.mubr.bf16.gmra.mxu0 %v482
      %v603 = vpop.f32.mrf.mxu0
      %v604 = vadd.f32 0.0, %v603
      %v605 = vpop.f32.mrf.mxu0
      %v606 = vpop.f32.mrf.mxu0
      %v607 = vadd.f32 0.0, %v606
      %v608 = vpop.f32.mrf.mxu0
      %609 = vmatprep.mubr.bf16.mxu0 0
      %610 = vmatmul.mubr.bf16.gmra.mxu0 %v483
      %v611 = vpop.f32.mrf.mxu0
      %v612 = vadd.f32 0.0, %v611
      %v613 = vpop.f32.mrf.mxu0
      %v614 = vpop.f32.mrf.mxu0
      %v615 = vadd.f32 0.0, %v614
      %v616 = vpop.f32.mrf.mxu0
      %617 = vmatprep.mubr.bf16.mxu0 0
      %618 = vmatmul.mubr.bf16.gmra.mxu0 %v484
      %v619 = vpop.f32.mrf.mxu0
      %v620 = vadd.f32 0.0, %v619
      %v621 = vpop.f32.mrf.mxu0
      %v622 = vpop.f32.mrf.mxu0
      %v623 = vadd.f32 0.0, %v622
      %v624 = vpop.f32.mrf.mxu0
      %625 = vmatprep.mubr.bf16.mxu0 0
      %626 = vmatmul.mubr.bf16.gmra.mxu0 %v485
      %v627 = vpop.f32.mrf.mxu0
      %v628 = vadd.f32 0.0, %v627
      %v629 = vpop.f32.mrf.mxu0
      %v630 = vpop.f32.mrf.mxu0
      %v631 = vadd.f32 0.0, %v630
      %v632 = vpop.f32.mrf.mxu0
      %633 = vmatprep.mubr.bf16.mxu0 0
      %634 = vmatmul.mubr.bf16.gmra.mxu0 %v486
      %v635 = vpop.f32.mrf.mxu0
      %v636 = vadd.f32 0.0, %v635
      %v637 = vpop.f32.mrf.mxu0
      %v638 = vpop.f32.mrf.mxu0
      %v639 = vadd.f32 0.0, %v638
      %v640 = vpop.f32.mrf.mxu0
      %641 = vmatprep.mubr.bf16.mxu0 0
      %642 = vmatmul.mubr.bf16.gmra.mxu0 %v487
      %v643 = vpop.f32.mrf.mxu0
      %v644 = vadd.f32 0.0, %v643
      %v645 = vpop.f32.mrf.mxu0
      %v646 = vpop.f32.mrf.mxu0
      %v647 = vadd.f32 0.0, %v646
      %v648 = vpop.f32.mrf.mxu0
      %649 = vmatprep.mubr.bf16.mxu0 0
      %650 = vmatmul.mubr.bf16.gmra.mxu0 %v488
      %v651 = vpop.f32.mrf.mxu0
      %v652 = vadd.f32 0.0, %v651
      %v653 = vpop.f32.mrf.mxu0
      %v654 = vpop.f32.mrf.mxu0
      %v655 = vadd.f32 0.0, %v654
      %v656 = vpop.f32.mrf.mxu0
      %657 = vmatprep.mubr.bf16.mxu0 0
      %658 = vmatmul.mubr.bf16.gmra.mxu0 %v489
      %v659 = vpop.f32.mrf.mxu0
      %v660 = vadd.f32 0.0, %v659
      %v661 = vpop.f32.mrf.mxu0
      %v662 = vpop.f32.mrf.mxu0
      %v663 = vadd.f32 0.0, %v662
      %v664 = vpop.f32.mrf.mxu0
      %665 = vmatprep.mubr.bf16.mxu0 0
      %666 = vmatmul.mubr.bf16.gmra.mxu0 %v490
      %v667 = vpop.f32.mrf.mxu0
      %v668 = vadd.f32 0.0, %v667
      %v669 = vpop.f32.mrf.mxu0
      %v670 = vpop.f32.mrf.mxu0
      %v671 = vadd.f32 0.0, %v670
      %v672 = vpop.f32.mrf.mxu0
      %673 = vmatprep.mubr.bf16.mxu0 0
      %674 = vmatmul.mubr.bf16.gmra.mxu0 %v491
      %v675 = vpop.f32.mrf.mxu0
      %v676 = vadd.f32 0.0, %v675
      %v677 = vpop.f32.mrf.mxu0
      %v678 = vpop.f32.mrf.mxu0
      %v679 = vadd.f32 0.0, %v678
      %v680 = vpop.f32.mrf.mxu0
      %681 = vmatprep.mubr.bf16.mxu0 0
      %682 = vmatmul.mubr.bf16.gmra.mxu0 %v492
      %v683 = vpop.f32.mrf.mxu0
      %v684 = vadd.f32 0.0, %v683
      %v685 = vpop.f32.mrf.mxu0
      %v686 = vpop.f32.mrf.mxu0
      %v687 = vadd.f32 0.0, %v686
      %v688 = vpop.f32.mrf.mxu0
      %689 = vmatprep.mubr.bf16.mxu0 0
      %690 = vmatmul.mubr.bf16.gmra.mxu0 %v493
      %v691 = vpop.f32.mrf.mxu0
      %v692 = vadd.f32 0.0, %v691
      %v693 = vpop.f32.mrf.mxu0
      %v694 = vpop.f32.mrf.mxu0
      %v695 = vadd.f32 0.0, %v694
      %v696 = vpop.f32.mrf.mxu0
      %697 = vmatprep.mubr.bf16.mxu0 0
      %698 = vmatmul.mubr.bf16.gmra.mxu0 %v494
      %v699 = vpop.f32.mrf.mxu0
      %v700 = vadd.f32 0.0, %v699
      %v701 = vpop.f32.mrf.mxu0
      %v702 = vpop.f32.mrf.mxu0
      %v703 = vadd.f32 0.0, %v702
      %v704 = vpop.f32.mrf.mxu0
      %705 = vmatprep.mubr.bf16.mxu0 0
      %706 = vmatmul.mubr.bf16.gmra.mxu0 %v495
      %v707 = vpop.f32.mrf.mxu0
      %v708 = vadd.f32 0.0, %v707
      %v709 = vpop.f32.mrf.mxu0
      %v710 = vpop.f32.mrf.mxu0
      %v711 = vadd.f32 0.0, %v710
      %v712 = vpop.f32.mrf.mxu0
      %713 = vmatprep.mubr.bf16.mxu0 0
      %714 = vmatmul.mubr.bf16.gmra.mxu0 %v496
      %v715 = vpop.f32.mrf.mxu0
      %v716 = vadd.f32 0.0, %v715
      %v717 = vpop.f32.mrf.mxu0
      %v718 = vpop.f32.mrf.mxu0
      %v719 = vadd.f32 0.0, %v718
      %v720 = vpop.f32.mrf.mxu0
      %721 = vdwg.mxu0
      %v722 = vadd.f32 %v337, %v596
      %v723 = vadd.f32 %v338, %v599
      %v724 = vadd.f32 %v339, %v604
      %v725 = vadd.f32 %v340, %v607
      %v726 = vadd.f32 %v341, %v612
      %v727 = vadd.f32 %v342, %v615
      %v728 = vadd.f32 %v343, %v620
      %v729 = vadd.f32 %v344, %v623
      %v730 = vadd.f32 %v345, %v628
      %v731 = vadd.f32 %v346, %v631
      %v732 = vadd.f32 %v347, %v636
      %v733 = vadd.f32 %v348, %v639
      %v734 = vadd.f32 %v349, %v644
      %v735 = vadd.f32 %v350, %v647
      %v736 = vadd.f32 %v351, %v652
      %v737 = vadd.f32 %v352, %v655
      %v738 = vadd.f32 %v353, %v660
      %v739 = vadd.f32 %v354, %v663
      %v740 = vadd.f32 %v355, %v668
      %v741 = vadd.f32 %v356, %v671
      %v742 = vadd.f32 %v357, %v676
      %v743 = vadd.f32 %v358, %v679
      %v744 = vadd.f32 %v359, %v684
      %v745 = vadd.f32 %v360, %v687
      %v746 = vadd.f32 %v361, %v692
      %v747 = vadd.f32 %v362, %v695
      %v748 = vadd.f32 %v363, %v700
      %v749 = vadd.f32 %v364, %v703
      %v750 = vadd.f32 %v365, %v708
      %v751 = vadd.f32 %v366, %v711
      %v752 = vadd.f32 %v367, %v716
      %v753 = vadd.f32 %v368, %v719
      %754 = vst [vmem:[%s298] sm:$0xff] %v722
      %755 = vst [vmem:[%s298 + $0x8] sm:$0xff] %v723
      %756 = vst [vmem:[%s298 + $0x10] sm:$0xff] %v724
      %757 = vst [vmem:[%s298 + $0x18] sm:$0xff] %v725
      %758 = vst [vmem:[%s298 + $0x20] sm:$0xff] %v726
      %759 = vst [vmem:[%s298 + $0x28] sm:$0xff] %v727
      %760 = vst [vmem:[%s298 + $0x30] sm:$0xff] %v728
      %761 = vst [vmem:[%s298 + $0x38] sm:$0xff] %v729
      %762 = vst [vmem:[%s298 + $0x40] sm:$0xff] %v730
      %763 = vst [vmem:[%s298 + $0x48] sm:$0xff] %v731
      %764 = vst [vmem:[%s298 + $0x50] sm:$0xff] %v732
      %765 = vst [vmem:[%s298 + $0x58] sm:$0xff] %v733
      %766 = vst [vmem:[%s298 + $0x60] sm:$0xff] %v734
      %767 = vst [vmem:[%s298 + $0x68] sm:$0xff] %v735
      %768 = vst [vmem:[%s298 + $0x70] sm:$0xff] %v736
      %769 = vst [vmem:[%s298 + $0x78] sm:$0xff] %v737
      %770 = vst [vmem:[%s298 + $0x80] sm:$0xff] %v738
      %771 = vst [vmem:[%s298 + $0x88] sm:$0xff] %v739
      %772 = vst [vmem:[%s298 + $0x90] sm:$0xff] %v740
      %773 = vst [vmem:[%s298 + $0x98] sm:$0xff] %v741
      %774 = vst [vmem:[%s298 + $0xa0] sm:$0xff] %v742
      %775 = vst [vmem:[%s298 + $0xa8] sm:$0xff] %v743
      %776 = vst [vmem:[%s298 + $0xb0] sm:$0xff] %v744
      %777 = vst [vmem:[%s298 + $0xb8] sm:$0xff] %v745
      %778 = vst [vmem:[%s298 + $0xc0] sm:$0xff] %v746
      %779 = vst [vmem:[%s298 + $0xc8] sm:$0xff] %v747
      %780 = vst [vmem:[%s298 + $0xd0] sm:$0xff] %v748
      %781 = vst [vmem:[%s298 + $0xd8] sm:$0xff] %v749
      %782 = vst [vmem:[%s298 + $0xe0] sm:$0xff] %v750
      %783 = vst [vmem:[%s298 + $0xe8] sm:$0xff] %v751
      %784 = vst [vmem:[%s298 + $0xf0] sm:$0xff] %v752
      %785 = vst [vmem:[%s298 + $0xf8] sm:$0xff] %v753
      // Predicated region
      $region41: #{upsampler_block.1} parent=35 // pred_check
        %p786 = pneg %p301
      $region42: #{upsampler_block.1} parent=35 // pred_check_branch
        %788 = sbr.rel (%p786) target = $region44
      $region43: #{upsampler_block.1} parent=35 // pred_region
        %v789 = vld [vmem:[%s298] sm:$0xff]
        %v790 = vld [vmem:[%s298 + $0x8] sm:$0xff]
        %v791 = vld [vmem:[%s298 + $0x10] sm:$0xff]
        %v792 = vld [vmem:[%s298 + $0x18] sm:$0xff]
        %v793 = vld [vmem:[%s298 + $0x20] sm:$0xff]
        %v794 = vld [vmem:[%s298 + $0x28] sm:$0xff]
        %v795 = vld [vmem:[%s298 + $0x30] sm:$0xff]
        %v796 = vld [vmem:[%s298 + $0x38] sm:$0xff]
        %v797 = vld [vmem:[%s298 + $0x40] sm:$0xff]
        %v798 = vld [vmem:[%s298 + $0x48] sm:$0xff]
        %v799 = vld [vmem:[%s298 + $0x50] sm:$0xff]
        %v800 = vld [vmem:[%s298 + $0x58] sm:$0xff]
        %v801 = vld [vmem:[%s298 + $0x60] sm:$0xff]
        %v802 = vld [vmem:[%s298 + $0x68] sm:$0xff]
        %v803 = vld [vmem:[%s298 + $0x70] sm:$0xff]
        %v804 = vld [vmem:[%s298 + $0x78] sm:$0xff]
        %v805 = vld [vmem:[%s298 + $0x80] sm:$0xff]
        %v806 = vld [vmem:[%s298 + $0x88] sm:$0xff]
        %v807 = vld [vmem:[%s298 + $0x90] sm:$0xff]
        %v808 = vld [vmem:[%s298 + $0x98] sm:$0xff]
        %v809 = vld [vmem:[%s298 + $0xa0] sm:$0xff]
        %v810 = vld [vmem:[%s298 + $0xa8] sm:$0xff]
        %v811 = vld [vmem:[%s298 + $0xb0] sm:$0xff]
        %v812 = vld [vmem:[%s298 + $0xb8] sm:$0xff]
        %v813 = vld [vmem:[%s298 + $0xc0] sm:$0xff]
        %v814 = vld [vmem:[%s298 + $0xc8] sm:$0xff]
        %v815 = vld [vmem:[%s298 + $0xd0] sm:$0xff]
        %v816 = vld [vmem:[%s298 + $0xd8] sm:$0xff]
        %v817 = vld [vmem:[%s298 + $0xe0] sm:$0xff]
        %v818 = vld [vmem:[%s298 + $0xe8] sm:$0xff]
        %v819 = vld [vmem:[%s298 + $0xf0] sm:$0xff]
        %v820 = vld [vmem:[%s298 + $0xf8] sm:$0xff]
        %v821 = vld [vmem:[%s287] sm:$0x1]
        %v823 = vlaneseq
        %v824 = vshrl.u32 %v823, 7
        %v825 = vsub.s32 0, %v824
        %v826 = vrot.slane %v821, %v825
        %v828 = vmul.f32 %v789, %v826
        %v829 = vmul.f32 %v790, %v826
        %v830 = vmul.f32 %v791, %v826
        %v831 = vmul.f32 %v792, %v826
        %v832 = vmul.f32 %v793, %v826
        %v833 = vmul.f32 %v794, %v826
        %v834 = vmul.f32 %v795, %v826
        %v835 = vmul.f32 %v796, %v826
        %v836 = vmul.f32 %v797, %v826
        %v837 = vmul.f32 %v798, %v826
        %v838 = vmul.f32 %v799, %v826
        %v839 = vmul.f32 %v800, %v826
        %v840 = vmul.f32 %v801, %v826
        %v841 = vmul.f32 %v802, %v826
        %v842 = vmul.f32 %v803, %v826
        %v843 = vmul.f32 %v804, %v826
        %v844 = vmul.f32 %v805, %v826
        %v845 = vmul.f32 %v806, %v826
        %v846 = vmul.f32 %v807, %v826
        %v847 = vmul.f32 %v808, %v826
        %v848 = vmul.f32 %v809, %v826
        %v849 = vmul.f32 %v810, %v826
        %v850 = vmul.f32 %v811, %v826
        %v851 = vmul.f32 %v812, %v826
        %v852 = vmul.f32 %v813, %v826
        %v853 = vmul.f32 %v814, %v826
        %v854 = vmul.f32 %v815, %v826
        %v855 = vmul.f32 %v816, %v826
        %v856 = vmul.f32 %v817, %v826
        %v857 = vmul.f32 %v818, %v826
        %v858 = vmul.f32 %v819, %v826
        %v859 = vmul.f32 %v820, %v826
        %v860 = vld [vmem:[%s290] sm:$0x1]
        %v862 = vlaneseq
        %v863 = vshrl.u32 %v862, 7
        %v864 = vsub.s32 0, %v863
        %v865 = vrot.slane %v860, %v864
        %v867 = vadd.f32 %v828, %v865
        %v868 = vadd.f32 %v829, %v865
        %v869 = vadd.f32 %v830, %v865
        %v870 = vadd.f32 %v831, %v865
        %v871 = vadd.f32 %v832, %v865
        %v872 = vadd.f32 %v833, %v865
        %v873 = vadd.f32 %v834, %v865
        %v874 = vadd.f32 %v835, %v865
        %v875 = vadd.f32 %v836, %v865
        %v876 = vadd.f32 %v837, %v865
        %v877 = vadd.f32 %v838, %v865
        %v878 = vadd.f32 %v839, %v865
        %v879 = vadd.f32 %v840, %v865
        %v880 = vadd.f32 %v841, %v865
        %v881 = vadd.f32 %v842, %v865
        %v882 = vadd.f32 %v843, %v865
        %v883 = vadd.f32 %v844, %v865
        %v884 = vadd.f32 %v845, %v865
        %v885 = vadd.f32 %v846, %v865
        %v886 = vadd.f32 %v847, %v865
        %v887 = vadd.f32 %v848, %v865
        %v888 = vadd.f32 %v849, %v865
        %v889 = vadd.f32 %v850, %v865
        %v890 = vadd.f32 %v851, %v865
        %v891 = vadd.f32 %v852, %v865
        %v892 = vadd.f32 %v853, %v865
        %v893 = vadd.f32 %v854, %v865
        %v894 = vadd.f32 %v855, %v865
        %v895 = vadd.f32 %v856, %v865
        %v896 = vadd.f32 %v857, %v865
        %v897 = vadd.f32 %v858, %v865
        %v898 = vadd.f32 %v859, %v865
        %v899 = vmax.f32 %v867, 0.0
        %v900 = vmax.f32 %v868, 0.0
        %v901 = vmax.f32 %v869, 0.0
        %v902 = vmax.f32 %v870, 0.0
        %v903 = vmax.f32 %v871, 0.0
        %v904 = vmax.f32 %v872, 0.0
        %v905 = vmax.f32 %v873, 0.0
        %v906 = vmax.f32 %v874, 0.0
        %v907 = vmax.f32 %v875, 0.0
        %v908 = vmax.f32 %v876, 0.0
        %v909 = vmax.f32 %v877, 0.0
        %v910 = vmax.f32 %v878, 0.0
        %v911 = vmax.f32 %v879, 0.0
        %v912 = vmax.f32 %v880, 0.0
        %v913 = vmax.f32 %v881, 0.0
        %v914 = vmax.f32 %v882, 0.0
        %v915 = vmax.f32 %v883, 0.0
        %v916 = vmax.f32 %v884, 0.0
        %v917 = vmax.f32 %v885, 0.0
        %v918 = vmax.f32 %v886, 0.0
        %v919 = vmax.f32 %v887, 0.0
        %v920 = vmax.f32 %v888, 0.0
        %v921 = vmax.f32 %v889, 0.0
        %v922 = vmax.f32 %v890, 0.0
        %v923 = vmax.f32 %v891, 0.0
        %v924 = vmax.f32 %v892, 0.0
        %v925 = vmax.f32 %v893, 0.0
        %v926 = vmax.f32 %v894, 0.0
        %v927 = vmax.f32 %v895, 0.0
        %v928 = vmax.f32 %v896, 0.0
        %v929 = vmax.f32 %v897, 0.0
        %v930 = vmax.f32 %v898, 0.0
        %931 = vst [vmem:[%s298] sm:$0xff] %v899
        %932 = vst [vmem:[%s298 + $0x8] sm:$0xff] %v900
        %933 = vst [vmem:[%s298 + $0x10] sm:$0xff] %v901
        %934 = vst [vmem:[%s298 + $0x18] sm:$0xff] %v902
        %935 = vst [vmem:[%s298 + $0x20] sm:$0xff] %v903
        %936 = vst [vmem:[%s298 + $0x28] sm:$0xff] %v904
        %937 = vst [vmem:[%s298 + $0x30] sm:$0xff] %v905
        %938 = vst [vmem:[%s298 + $0x38] sm:$0xff] %v906
        %939 = vst [vmem:[%s298 + $0x40] sm:$0xff] %v907
        %940 = vst [vmem:[%s298 + $0x48] sm:$0xff] %v908
        %941 = vst [vmem:[%s298 + $0x50] sm:$0xff] %v909
        %942 = vst [vmem:[%s298 + $0x58] sm:$0xff] %v910
        %943 = vst [vmem:[%s298 + $0x60] sm:$0xff] %v911
        %944 = vst [vmem:[%s298 + $0x68] sm:$0xff] %v912
        %945 = vst [vmem:[%s298 + $0x70] sm:$0xff] %v913
        %946 = vst [vmem:[%s298 + $0x78] sm:$0xff] %v914
        %947 = vst [vmem:[%s298 + $0x80] sm:$0xff] %v915
        %948 = vst [vmem:[%s298 + $0x88] sm:$0xff] %v916
        %949 = vst [vmem:[%s298 + $0x90] sm:$0xff] %v917
        %950 = vst [vmem:[%s298 + $0x98] sm:$0xff] %v918
        %951 = vst [vmem:[%s298 + $0xa0] sm:$0xff] %v919
        %952 = vst [vmem:[%s298 + $0xa8] sm:$0xff] %v920
        %953 = vst [vmem:[%s298 + $0xb0] sm:$0xff] %v921
        %954 = vst [vmem:[%s298 + $0xb8] sm:$0xff] %v922
        %955 = vst [vmem:[%s298 + $0xc0] sm:$0xff] %v923
        %956 = vst [vmem:[%s298 + $0xc8] sm:$0xff] %v924
        %957 = vst [vmem:[%s298 + $0xd0] sm:$0xff] %v925
        %958 = vst [vmem:[%s298 + $0xd8] sm:$0xff] %v926
        %959 = vst [vmem:[%s298 + $0xe0] sm:$0xff] %v927
        %960 = vst [vmem:[%s298 + $0xe8] sm:$0xff] %v928
        %961 = vst [vmem:[%s298 + $0xf0] sm:$0xff] %v929
        %962 = vst [vmem:[%s298 + $0xf8] sm:$0xff] %v930
      $region44: #{upsampler_block.1} parent=35 // pred_fallthru
        _
      %s963 = smul.u32 32, %s20
      %p964 = scmp.lt.s32.totalorder %s963, 63
      %s965 = scalar_select %p964, %s963, 63
      %p966 = scmp.lt.s32.totalorder %s21, 0
      %s967 = scalar_select %p966, %s21, 0
      %s968 = sadd.s32 %s967, %s965
      %s969 = smul.addr %s968, 8
      %s970 = scalar_lea.vmem %s4, %s969
      // Predicated region
      $region45: #{upsampler_block.1} parent=35 // pred_check
        %p971 = pneg %p162
      $region46: #{upsampler_block.1} parent=35 // pred_check_branch
        %973 = sbr.rel (%p971) target = $region48
      $region47: #{upsampler_block.1} parent=35 // pred_region
        %s974 = smul.u32 32, %s20
      $region48: #{upsampler_block.1} parent=35 // pred_fallthru
        _
    $region36: #{upsampler_block.1} parent=5 // pred_fallthru
      _
    %p975 = scmp.le.s32.totalorder 2, %s10
    // Predicated region
    $region49: #{upsampler_block.1} parent=5 // pred_check
      %p976 = pneg %p975
    $region50: #{upsampler_block.1} parent=5 // pred_check_branch
      %978 = sbr.rel (%p976) target = $region52
    $region51: #{upsampler_block.1} parent=5 // pred_region
      %s979 = ssub.s32 %s10, 2
      // Predicated region
      $region53: #{upsampler_block.1} parent=51 // pred_check
        %p980 = pneg %p168
      $region54: #{upsampler_block.1} parent=51 // pred_check_branch
        %982 = sbr.rel (%p980) target = $region56
      $region55: #{upsampler_block.1} parent=51 // pred_region
        %s983 = smul.u32 32, %s23
        %p984 = scmp.lt.s32.totalorder %s983, 63
        %s985 = scalar_select %p984, %s983, 63
        %p986 = scmp.lt.s32.totalorder %s24, 0
        %s987 = scalar_select %p986, %s24, 0
        %s988 = sadd.s32 %s987, %s985
        %s989 = smul.addr %s988, 8
        %s990 = scalar_lea.vmem %s4, %s989
      $region56: #{upsampler_block.1} parent=51 // pred_fallthru
        _
    $region52: #{upsampler_block.1} parent=5 // pred_fallthru
      _
  $region6: #{upsampler_block.1} parent=0 // loop_footer
    %s14 = sadd.s32 1, %s10
  $region7: #{upsampler_block.1} parent=0 // loop_footer_branch
    %9 = sbr.rel target = $region3
  $region8: #{upsampler_block.1} parent=0 // loop_exit
    _

</llo_original>
